<compile_context>
chip_gen: v7x
topology: tpu7x:2x2x1
jax: 0.10.0
libtpu: 0.0.40
codegen_flags: <defaults>
</compile_context>

<pallas_src>
import functools

import jax
import jax.numpy as jnp
from jax.experimental import pallas as pl
from jax.experimental.pallas import tpu as pltpu

HIDDEN = 128
BN_EPS = 1e-5
MAX_BATCH_TILE = 512                      # rows per batch tile (multiple of 8 for f32 sublanes)
VMEM_LIMIT = 48 * 1024 * 1024             # explicit budget; headroom under v7x's 64 MiB physical


def _round_up(n, m):
    return ((n + m - 1) // m) * m


# ---------------- pass 1: BN1 batch moments (sum, sum-of-squares) ----------------
def _stats1_kernel(x_ref, mom_ref):
    @pl.when(pl.program_id(0) == 0)
    def _():
        mom_ref[...] = jnp.zeros_like(mom_ref)

    x = x_ref[...].astype(jnp.float32)                      # (TB, F)
    s = jnp.sum(x, axis=0, keepdims=True)                   # (1, F)
    sq = jnp.sum(x * x, axis=0, keepdims=True)               # (1, F)
    mom_ref[...] += jnp.concatenate([s, sq], axis=0)         # (2, F) accumulator


# -------- pass 2: folded BN1 + Linear1 (bf16 MXU) + ReLU + partial BN2 moments ----
def _hidden_kernel(x_ref, s1_ref, t1_ref, w1_ref, bi1_ref, h_ref, mom_ref,
                   *, tb, n_valid):
    x = x_ref[...].astype(jnp.float32)                      # (TB, F)
    xh = x * s1_ref[...] + t1_ref[...]                      # folded BN1 (f32, 2 VPU ops/elem)
    h = jnp.dot(xh.astype(jnp.bfloat16), w1_ref[...],       # bf16 operands, f32 accumulate
                preferred_element_type=jnp.float32) + bi1_ref[...]
    h = jnp.maximum(h, 0.0)                                  # (TB, 128) f32

    if n_valid is not None:                                  # zero out padded batch rows
        rows = pl.program_id(0) * tb + jax.lax.broadcasted_iota(jnp.int32, (tb, 1), 0)
        h = jnp.where(rows < n_valid, h, 0.0)

    h_ref[...] = h.astype(h_ref.dtype)                       # bf16 activations to HBM
    sh = jnp.sum(h, axis=0, keepdims=True)                   # (1, 128) partial moments
    sq = jnp.sum(h * h, axis=0, keepdims=True)
    mom_ref[0] = jnp.concatenate([sh, sq], axis=0)            # (2, 128)


# ---------------- pass 3: folded BN2 + Linear2 (lane-dense output) ----------------
def _out_kernel(h_ref, w2_ref, b2_ref, o_ref):
    acc = jnp.dot(h_ref[...], w2_ref[...], preferred_element_type=jnp.float32)
    o_ref[...] = (acc + b2_ref[...]).astype(o_ref.dtype)


def outmlp_forward(x, params):
    B, F = x.shape
    out_feats = params["w2"].shape[1]

    TB = min(MAX_BATCH_TILE, _round_up(max(B, 8), 8))
    B_pad = _round_up(B, TB)
    n_bt = B_pad // TB
    OUT_PAD = _round_up(out_feats, 128)                      # lane-dense output stores

    xf = x.astype(jnp.float32)
    if B_pad != B:
        xf = jnp.pad(xf, ((0, B_pad - B), (0, 0)))           # zero rows: no effect on sums

    # ---- pass 1: BN1 statistics (single-sweep sum / sum-of-squares) ----
    moments1 = pl.pallas_call(
        _stats1_kernel,
        out_shape=jax.ShapeDtypeStruct((2, F), jnp.float32),
        grid=(n_bt,),
        in_specs=[pl.BlockSpec((TB, F), lambda i: (i, 0))],
        out_specs=pl.BlockSpec((2, F), lambda i: (0, 0)),     # resident accumulator
        compiler_params=pltpu.CompilerParams(
            dimension_semantics=("arbitrary",),
            vmem_limit_bytes=VMEM_LIMIT),
    )(xf)

    mean1 = moments1[0][None, :] / B                          # (1, F)
    var1 = jnp.maximum(moments1[1][None, :] / B - mean1 * mean1, 0.0)
    s1 = params["g1"] * jax.lax.rsqrt(var1 + BN_EPS)          # BN1 folded to scale/shift
    t1 = params["b1"] - mean1 * s1

    # ---- pass 2: hidden layer + BN2 partial statistics ----
    kern2 = functools.partial(_hidden_kernel, tb=TB,
                              n_valid=(B if B_pad != B else None))
    h_bf16, stats2 = pl.pallas_call(
        kern2,
        out_shape=(jax.ShapeDtypeStruct((B_pad, HIDDEN), jnp.bfloat16),
                   jax.ShapeDtypeStruct((n_bt, 2, HIDDEN), jnp.float32)),
        grid=(n_bt,),
        in_specs=[pl.BlockSpec((TB, F), lambda i: (i, 0)),
                  pl.BlockSpec((1, F), lambda i: (0, 0)),
                  pl.BlockSpec((1, F), lambda i: (0, 0)),
                  pl.BlockSpec((F, HIDDEN), lambda i: (0, 0)),
                  pl.BlockSpec((1, HIDDEN), lambda i: (0, 0))],
        out_specs=(pl.BlockSpec((TB, HIDDEN), lambda i: (i, 0)),
                   pl.BlockSpec((1, 2, HIDDEN), lambda i: (i, 0, 0))),
        compiler_params=pltpu.CompilerParams(
            dimension_semantics=("parallel",),               # megacore-splittable on v7x
            vmem_limit_bytes=VMEM_LIMIT),
    )(xf, s1, t1, params["w1"], params["bi1"])

    sums2 = jnp.sum(stats2, axis=0)                           # (2, 128) tiny wrapper reduce
    mean2 = (sums2[0] / B)[None, :]                           # (1, 128)
    var2 = jnp.maximum(sums2[1][None, :] / B - mean2 * mean2, 0.0)
    s2 = params["g2"] * jax.lax.rsqrt(var2 + BN_EPS)
    t2 = params["b2"] - mean2 * s2
    w2_eff = s2.reshape(HIDDEN, 1) * params["w2"]             # fold BN2 scale into w2
    b2_eff = t2 @ params["w2"] + params["bi2"]                # fold BN2 shift into the bias
    if OUT_PAD != out_feats:
        w2_eff = jnp.pad(w2_eff, ((0, 0), (0, OUT_PAD - out_feats)))
        b2_eff = jnp.pad(b2_eff, ((0, 0), (0, OUT_PAD - out_feats)))
    w2_eff = w2_eff.astype(jnp.bfloat16)

    # ---- pass 3: output layer ----
    out = pl.pallas_call(
        _out_kernel,
        out_shape=jax.ShapeDtypeStruct((B_pad, OUT_PAD), jnp.float32),
        grid=(n_bt,),
        in_specs=[pl.BlockSpec((TB, HIDDEN), lambda i: (i, 0)),
                  pl.BlockSpec((HIDDEN, OUT_PAD), lambda i: (0, 0)),
                  pl.BlockSpec((1, OUT_PAD), lambda i: (0, 0))],
        out_specs=pl.BlockSpec((TB, OUT_PAD), lambda i: (i, 0)),
        compiler_params=pltpu.CompilerParams(
            dimension_semantics=("parallel",),
            vmem_limit_bytes=VMEM_LIMIT),
    )(h_bf16, w2_eff, b2_eff)

    return out[:B, :out_feats].astype(x.dtype)


def init_params(key, in_feats, out_feats):
    k = jax.random.split(key, 8)
    # BatchNorm affine params (perturbed from PyTorch's gamma=1/beta=0 defaults), (1, C) rows.
    g1 = 1.0 + 0.1 * jax.random.normal(k[0], (1, in_feats), jnp.float32)
    b1 = 0.1 * jax.random.normal(k[1], (1, in_feats), jnp.float32)
    g2 = 1.0 + 0.1 * jax.random.normal(k[2], (1, HIDDEN), jnp.float32)
    b2 = 0.1 * jax.random.normal(k[3], (1, HIDDEN), jnp.float32)
    # Linear weights stored transposed (in, out); w1 kept in bf16 at rest (MXU-native).
    lim1 = 1.0 / float(in_feats) ** 0.5
    w1 = jax.random.uniform(k[4], (in_feats, HIDDEN), jnp.float32, -lim1, lim1)
    bi1 = jax.random.uniform(k[5], (1, HIDDEN), jnp.float32, -lim1, lim1)
    lim2 = 1.0 / float(HIDDEN) ** 0.5
    w2 = jax.random.uniform(k[6], (HIDDEN, out_feats), jnp.float32, -lim2, lim2)
    bi2 = jax.random.uniform(k[7], (1, out_feats), jnp.float32, -lim2, lim2)
    return dict(g1=g1, b1=b1, w1=w1.astype(jnp.bfloat16), bi1=bi1,
                g2=g2, b2=b2, w2=w2, bi2=bi2)


def reference_forward(x, p):
    # Pure-JAX reference of the same math (training-mode BN; bf16 operands at the MXU).
    xf = x.astype(jnp.float32)
    mu1 = xf.mean(0, keepdims=True)
    v1 = jnp.maximum((xf * xf).mean(0, keepdims=True) - mu1 * mu1, 0.0)
    s1 = p["g1"] * jax.lax.rsqrt(v1 + BN_EPS)
    t1 = p["b1"] - mu1 * s1
    xh = xf * s1 + t1
    h = jnp.maximum(jnp.dot(xh.astype(jnp.bfloat16), p["w1"],
                            preferred_element_type=jnp.float32) + p["bi1"], 0.0)
    mu2 = h.mean(0, keepdims=True)
    v2 = jnp.maximum((h * h).mean(0, keepdims=True) - mu2 * mu2, 0.0)
    s2 = p["g2"] * jax.lax.rsqrt(v2 + BN_EPS)
    t2 = p["b2"] - mu2 * s2
    hh = h * s2 + t2
    out = jnp.dot(hh.astype(jnp.bfloat16), p["w2"].astype(jnp.bfloat16),
                  preferred_element_type=jnp.float32) + p["bi2"]
    return out.astype(x.dtype)


if __name__ == "__main__":
    # batch not a multiple of 8 -> exercises the pad + in-kernel row-masking path.
    in_feats, out_feats, batch = 32, 16, 50
    key = jax.random.PRNGKey(0)
    kx, kp = jax.random.split(key)
    x = jax.random.normal(kx, (batch, in_feats), jnp.float32)
    params = init_params(kp, in_feats, out_feats)

    fwd = jax.jit(outmlp_forward)
    out = jax.block_until_ready(fwd(x, params))

    ref = reference_forward(x, params)
    assert out.shape == (batch, out_feats)
    # bf16 MXU operands with f32 accumulation -> compare with bf16-level tolerance.
    assert jnp.allclose(out, ref, atol=3e-2, rtol=3e-2), "mismatch vs JAX reference"
    print("KERNEL_OK")
</pallas_src>

<mosaic_0001>
module attributes {stable_mosaic.version = 11 : i64} {
  func.func @_stats1_kernel(%arg0: i32, %arg1: memref<56x32xf32, #tpu.memory_space<vmem>>, %arg2: memref<2x32xf32, #tpu.memory_space<vmem>>) attributes {dimension_semantics = [#tpu.dimension_semantics<arbitrary>], iteration_bounds = array<i64: 1>, scalar_prefetch = 0 : i64, scratch_operands = 0 : i64, tpu.core_type = #tpu.core_type<tc>, window_params = [{transform_indices = @transform_0, window_bounds = array<i64: 56, 32>}, {pipeline_mode = #tpu.pipeline_mode<synchronous>, transform_indices = @transform_1, window_bounds = array<i64: 2, 32>}]} {
    %c0_i32 = arith.constant 0 : i32
    %0 = arith.cmpi eq, %arg0, %c0_i32 : i32
    %1 = arith.extui %0 : i1 to i32
    %c0_i32_0 = arith.constant 0 : i32
    %2 = arith.cmpi ne, %1, %c0_i32_0 : i32
    scf.if %2 {
      %cst_7 = arith.constant 0.000000e+00 : f32
      %13 = vector.broadcast %cst_7 : f32 to vector<2x32xf32>
      %c0_8 = arith.constant 0 : index
      %c0_9 = arith.constant 0 : index
      %14 = vector.load %arg2[%c0_8, %c0_9] : memref<2x32xf32, #tpu.memory_space<vmem>>, vector<2x32xf32>
      tpu.vector_store %arg2[%c0_8, %c0_9], %13 {strides = array<i32>} : memref<2x32xf32, #tpu.memory_space<vmem>>, vector<2x32xf32>,
    } else {
    }
    %c0 = arith.constant 0 : index
    %c0_1 = arith.constant 0 : index
    %3 = vector.load %arg1[%c0, %c0_1] : memref<56x32xf32, #tpu.memory_space<vmem>>, vector<56x32xf32>
    %cst = arith.constant dense<0.000000e+00> : vector<32xf32>
    %4 = vector.multi_reduction <add>, %3, %cst [0] : vector<56x32xf32> to vector<32xf32>
    %5 = vector.shape_cast %4 : vector<32xf32> to vector<1x32xf32>
    %6 = arith.mulf %3, %3 : vector<56x32xf32>
    %cst_2 = arith.constant dense<0.000000e+00> : vector<32xf32>
    %7 = vector.multi_reduction <add>, %6, %cst_2 [0] : vector<56x32xf32> to vector<32xf32>
    %8 = vector.shape_cast %7 : vector<32xf32> to vector<1x32xf32>
    %c0_3 = arith.constant 0 : index
    %c0_4 = arith.constant 0 : index
    %9 = vector.load %arg2[%c0_3, %c0_4] : memref<2x32xf32, #tpu.memory_space<vmem>>, vector<2x32xf32>
    %10 = tpu.concatenate %5, %8 in 0 : vector<1x32xf32>, vector<1x32xf32> -> vector<2x32xf32>
    %11 = arith.addf %9, %10 : vector<2x32xf32>
    %c0_5 = arith.constant 0 : index
    %c0_6 = arith.constant 0 : index
    %12 = vector.load %arg2[%c0_5, %c0_6] : memref<2x32xf32, #tpu.memory_space<vmem>>, vector<2x32xf32>
    tpu.vector_store %arg2[%c0_5, %c0_6], %11 {strides = array<i32>} : memref<2x32xf32, #tpu.memory_space<vmem>>, vector<2x32xf32>,
    return
  }
  func.func @transform_0(%arg0: i32) -> (i32, i32) {
    %c0_i32 = arith.constant 0 : i32
    %c0_i32_0 = arith.constant 0 : i32
    return %arg0, %c0_i32 : i32, i32
  }
  func.func @transform_1(%arg0: i32) -> (i32, i32) {
    %c0_i32 = arith.constant 0 : i32
    %c0_i32_0 = arith.constant 0 : i32
    %c0_i32_1 = arith.constant 0 : i32
    return %c0_i32, %c0_i32_0 : i32, i32
  }
}

module attributes {stable_mosaic.version = 11 : i64} {
  func.func @_hidden_kernel(%arg0: i32, %arg1: memref<56x32xf32, #tpu.memory_space<vmem>>, %arg2: memref<1x32xf32, #tpu.memory_space<vmem>>, %arg3: memref<1x32xf32, #tpu.memory_space<vmem>>, %arg4: memref<32x128xbf16, #tpu.memory_space<vmem>>, %arg5: memref<1x128xf32, #tpu.memory_space<vmem>>, %arg6: memref<56x128xbf16, #tpu.memory_space<vmem>>, %arg7: memref<1x2x128xf32, #tpu.memory_space<vmem>>) attributes {dimension_semantics = [#tpu.dimension_semantics<parallel>], iteration_bounds = array<i64: 1>, scalar_prefetch = 0 : i64, scratch_operands = 0 : i64, tpu.core_type = #tpu.core_type<tc>, window_params = [{transform_indices = @transform_0, window_bounds = array<i64: 56, 32>}, {pipeline_mode = #tpu.pipeline_mode<synchronous>, transform_indices = @transform_1, window_bounds = array<i64: 1, 32>}, {pipeline_mode = #tpu.pipeline_mode<synchronous>, transform_indices = @transform_2, window_bounds = array<i64: 1, 32>}, {pipeline_mode = #tpu.pipeline_mode<synchronous>, transform_indices = @transform_3, window_bounds = array<i64: 32, 128>}, {pipeline_mode = #tpu.pipeline_mode<synchronous>, transform_indices = @transform_4, window_bounds = array<i64: 1, 128>}, {transform_indices = @transform_5, window_bounds = array<i64: 56, 128>}, {transform_indices = @transform_6, window_bounds = array<i64: 1, 2, 128>}]} {
    %c0 = arith.constant 0 : index
    %c0_0 = arith.constant 0 : index
    %0 = vector.load %arg1[%c0, %c0_0] : memref<56x32xf32, #tpu.memory_space<vmem>>, vector<56x32xf32>
    %c0_1 = arith.constant 0 : index
    %c0_2 = arith.constant 0 : index
    %1 = vector.load %arg2[%c0_1, %c0_2] : memref<1x32xf32, #tpu.memory_space<vmem>>, vector<1x32xf32>
    %2 = vector.broadcast %1 : vector<1x32xf32> to vector<56x32xf32>
    %3 = arith.mulf %0, %2 : vector<56x32xf32>
    %c0_3 = arith.constant 0 : index
    %c0_4 = arith.constant 0 : index
    %4 = vector.load %arg3[%c0_3, %c0_4] : memref<1x32xf32, #tpu.memory_space<vmem>>, vector<1x32xf32>
    %5 = vector.broadcast %4 : vector<1x32xf32> to vector<56x32xf32>
    %6 = arith.addf %3, %5 : vector<56x32xf32>
    %7 = arith.truncf %6 : vector<56x32xf32> to vector<56x32xbf16>
    %c0_5 = arith.constant 0 : index
    %c0_6 = arith.constant 0 : index
    %8 = vector.load %arg4[%c0_5, %c0_6] : memref<32x128xbf16, #tpu.memory_space<vmem>>, vector<32x128xbf16>
    %cst = arith.constant dense<0.000000e+00> : vector<56x128xf32>
    %9 = tpu.matmul %7, %8, %cst {dimension_numbers = #tpu.dot_dimension_numbers<[1], [0], [0], [1], [0, 0, 1, 1], [], []>} : vector<56x32xbf16>, vector<32x128xbf16>, vector<56x128xf32> -> vector<56x128xf32>
    %c0_7 = arith.constant 0 : index
    %c0_8 = arith.constant 0 : index
    %10 = vector.load %arg5[%c0_7, %c0_8] : memref<1x128xf32, #tpu.memory_space<vmem>>, vector<1x128xf32>
    %11 = vector.broadcast %10 : vector<1x128xf32> to vector<56x128xf32>
    %12 = arith.addf %9, %11 : vector<56x128xf32>
    %cst_9 = arith.constant 0.000000e+00 : f32
    %13 = vector.broadcast %cst_9 : f32 to vector<56x128xf32>
    %14 = arith.maximumf %12, %13 : vector<56x128xf32>
    %c56_i32 = arith.constant 56 : i32
    %15 = arith.muli %arg0, %c56_i32 : i32
    %16 = tpu.iota {dimensions = array<i32: 0>} : vector<56x1xi32>
    %17 = vector.broadcast %15 : i32 to vector<56x1xi32>
    %18 = arith.addi %17, %16 : vector<56x1xi32>
    %c50_i32 = arith.constant 50 : i32
    %19 = vector.broadcast %c50_i32 : i32 to vector<56x1xi32>
    %20 = arith.cmpi slt, %18, %19 : vector<56x1xi32>
    %cst_10 = arith.constant 0.000000e+00 : f32
    %21 = vector.shape_cast %20 : vector<56x1xi1> to vector<56x1xi1>
    %22 = vector.broadcast %21 : vector<56x1xi1> to vector<56x128xi1>
    %23 = vector.broadcast %cst_10 : f32 to vector<56x128xf32>
    %24 = arith.select %22, %14, %23 : vector<56x128xi1>, vector<56x128xf32>
    %25 = arith.truncf %24 : vector<56x128xf32> to vector<56x128xbf16>
    %c0_11 = arith.constant 0 : index
    %c0_12 = arith.constant 0 : index
    %26 = vector.load %arg6[%c0_11, %c0_12] : memref<56x128xbf16, #tpu.memory_space<vmem>>, vector<56x128xbf16>
    tpu.vector_store %arg6[%c0_11, %c0_12], %25 {strides = array<i32>} : memref<56x128xbf16, #tpu.memory_space<vmem>>, vector<56x128xbf16>,
    %cst_13 = arith.constant dense<0.000000e+00> : vector<128xf32>
    %27 = vector.multi_reduction <add>, %24, %cst_13 [0] : vector<56x128xf32> to vector<128xf32>
    %28 = vector.shape_cast %27 : vector<128xf32> to vector<1x128xf32>
    %29 = arith.mulf %24, %24 : vector<56x128xf32>
    %cst_14 = arith.constant dense<0.000000e+00> : vector<128xf32>
    %30 = vector.multi_reduction <add>, %29, %cst_14 [0] : vector<56x128xf32> to vector<128xf32>
    %31 = vector.shape_cast %30 : vector<128xf32> to vector<1x128xf32>
    %32 = tpu.concatenate %28, %31 in 0 : vector<1x128xf32>, vector<1x128xf32> -> vector<2x128xf32>
    %c0_15 = arith.constant 0 : index
    %c0_16 = arith.constant 0 : index
    %c0_17 = arith.constant 0 : index
    %33 = vector.load %arg7[%c0_15, %c0_16, %c0_17] : memref<1x2x128xf32, #tpu.memory_space<vmem>>, vector<1x2x128xf32>
    %34 = vector.shape_cast %33 : vector<1x2x128xf32> to vector<2x128xf32>
    %35 = vector.shape_cast %32 : vector<2x128xf32> to vector<1x2x128xf32>
    tpu.vector_store %arg7[%c0_15, %c0_16, %c0_17], %35 {strides = array<i32>} : memref<1x2x128xf32, #tpu.memory_space<vmem>>, vector<1x2x128xf32>,
    return
  }
  func.func @transform_0(%arg0: i32) -> (i32, i32) {
    %c0_i32 = arith.constant 0 : i32
    %c0_i32_0 = arith.constant 0 : i32
    return %arg0, %c0_i32 : i32, i32
  }
  func.func @transform_1(%arg0: i32) -> (i32, i32) {
    %c0_i32 = arith.constant 0 : i32
    %c0_i32_0 = arith.constant 0 : i32
    %c0_i32_1 = arith.constant 0 : i32
    return %c0_i32, %c0_i32_0 : i32, i32
  }
  func.func @transform_2(%arg0: i32) -> (i32, i32) {
    %c0_i32 = arith.constant 0 : i32
    %c0_i32_0 = arith.constant 0 : i32
    %c0_i32_1 = arith.constant 0 : i32
    return %c0_i32, %c0_i32_0 : i32, i32
  }
  func.func @transform_3(%arg0: i32) -> (i32, i32) {
    %c0_i32 = arith.constant 0 : i32
    %c0_i32_0 = arith.constant 0 : i32
    %c0_i32_1 = arith.constant 0 : i32
    return %c0_i32, %c0_i32_0 : i32, i32
  }
  func.func @transform_4(%arg0: i32) -> (i32, i32) {
    %c0_i32 = arith.constant 0 : i32
    %c0_i32_0 = arith.constant 0 : i32
    %c0_i32_1 = arith.constant 0 : i32
    return %c0_i32, %c0_i32_0 : i32, i32
  }
  func.func @transform_5(%arg0: i32) -> (i32, i32) {
    %c0_i32 = arith.constant 0 : i32
    %c0_i32_0 = arith.constant 0 : i32
    return %arg0, %c0_i32 : i32, i32
  }
  func.func @transform_6(%arg0: i32) -> (i32, i32, i32) {
    %c0_i32 = arith.constant 0 : i32
    %c0_i32_0 = arith.constant 0 : i32
    %c0_i32_1 = arith.constant 0 : i32
    return %arg0, %c0_i32, %c0_i32_0 : i32, i32, i32
  }
}

module attributes {stable_mosaic.version = 11 : i64} {
  func.func @_out_kernel(%arg0: i32, %arg1: memref<56x128xbf16, #tpu.memory_space<vmem>>, %arg2: memref<128x128xbf16, #tpu.memory_space<vmem>>, %arg3: memref<1x128xf32, #tpu.memory_space<vmem>>, %arg4: memref<56x128xf32, #tpu.memory_space<vmem>>) attributes {dimension_semantics = [#tpu.dimension_semantics<parallel>], iteration_bounds = array<i64: 1>, scalar_prefetch = 0 : i64, scratch_operands = 0 : i64, tpu.core_type = #tpu.core_type<tc>, window_params = [{transform_indices = @transform_0, window_bounds = array<i64: 56, 128>}, {pipeline_mode = #tpu.pipeline_mode<synchronous>, transform_indices = @transform_1, window_bounds = array<i64: 128, 128>}, {pipeline_mode = #tpu.pipeline_mode<synchronous>, transform_indices = @transform_2, window_bounds = array<i64: 1, 128>}, {transform_indices = @transform_3, window_bounds = array<i64: 56, 128>}]} {
    %c0 = arith.constant 0 : index
    %c0_0 = arith.constant 0 : index
    %0 = vector.load %arg1[%c0, %c0_0] : memref<56x128xbf16, #tpu.memory_space<vmem>>, vector<56x128xbf16>
    %c0_1 = arith.constant 0 : index
    %c0_2 = arith.constant 0 : index
    %1 = vector.load %arg2[%c0_1, %c0_2] : memref<128x128xbf16, #tpu.memory_space<vmem>>, vector<128x128xbf16>
    %cst = arith.constant dense<0.000000e+00> : vector<56x128xf32>
    %2 = tpu.matmul %0, %1, %cst {dimension_numbers = #tpu.dot_dimension_numbers<[1], [0], [0], [1], [0, 0, 1, 1], [], []>} : vector<56x128xbf16>, vector<128x128xbf16>, vector<56x128xf32> -> vector<56x128xf32>
    %c0_3 = arith.constant 0 : index
    %c0_4 = arith.constant 0 : index
    %3 = vector.load %arg3[%c0_3, %c0_4] : memref<1x128xf32, #tpu.memory_space<vmem>>, vector<1x128xf32>
    %4 = vector.broadcast %3 : vector<1x128xf32> to vector<56x128xf32>
    %5 = arith.addf %2, %4 : vector<56x128xf32>
    %c0_5 = arith.constant 0 : index
    %c0_6 = arith.constant 0 : index
    %6 = vector.load %arg4[%c0_5, %c0_6] : memref<56x128xf32, #tpu.memory_space<vmem>>, vector<56x128xf32>
    tpu.vector_store %arg4[%c0_5, %c0_6], %5 {strides = array<i32>} : memref<56x128xf32, #tpu.memory_space<vmem>>, vector<56x128xf32>,
    return
  }
  func.func @transform_0(%arg0: i32) -> (i32, i32) {
    %c0_i32 = arith.constant 0 : i32
    %c0_i32_0 = arith.constant 0 : i32
    return %arg0, %c0_i32 : i32, i32
  }
  func.func @transform_1(%arg0: i32) -> (i32, i32) {
    %c0_i32 = arith.constant 0 : i32
    %c0_i32_0 = arith.constant 0 : i32
    %c0_i32_1 = arith.constant 0 : i32
    return %c0_i32, %c0_i32_0 : i32, i32
  }
  func.func @transform_2(%arg0: i32) -> (i32, i32) {
    %c0_i32 = arith.constant 0 : i32
    %c0_i32_0 = arith.constant 0 : i32
    %c0_i32_1 = arith.constant 0 : i32
    return %c0_i32, %c0_i32_0 : i32, i32
  }
  func.func @transform_3(%arg0: i32) -> (i32, i32) {
    %c0_i32 = arith.constant 0 : i32
    %c0_i32_0 = arith.constant 0 : i32
    return %arg0, %c0_i32 : i32, i32
  }
}

</mosaic_0001>

<llo_original>
// kernel: outmlp_forward.3
$region0: #{outmlp_forward.3}
  #allocation0 [shape = 'u32[]', space=smem, size = 0x4, offset = 0x4, fixed_abs, tag = 'smem constant byte address 0x4 - core index']
  #allocation1 [shape = 'u32[144,128]{1,0:T(1,128)}', space=vmem, size = 0x12000, scoped, tag = 'internal scratch']
  %s0 = inlined_call_operand.vmem [shape: f32[56,32], index: 0, kind: input, shape index: {}]
  %s1 = inlined_call_operand.vmem [shape: f32[2,32], index: 1, kind: output, shape index: {}]
  %s2 = sld [smem:[#allocation0]]
  $region18: #{outmlp_forward.3} parent=0
    _
  %s4 = ssub.s32 1, %s2
  %s5 = scalar_select 0, %s4, %s2
  // Predicated region
  $region2: #{outmlp_forward.3} parent=0 // pred_check
    _
  $region3: #{outmlp_forward.3} parent=0 // pred_check_branch
    %7 = sbr.rel (0) target = $region5
  $region4: #{outmlp_forward.3} parent=0 // pred_region
    _
  $region5: #{outmlp_forward.3} parent=0 // pred_fallthru
    _
  %p8 = scmp.eq.s32.totalorder 0, 0
  // Predicated region
  $region6: #{outmlp_forward.3} parent=0 // pred_check
    %p9 = pneg %p8
  $region7: #{outmlp_forward.3} parent=0 // pred_check_branch
    %11 = sbr.rel (%p9) target = $region9
  $region8: #{outmlp_forward.3} parent=0 // pred_region
    %vm12 = vcmask 254976
    %13 = vst.msk [vmem:[%s1] sm:$0x3] %vm12, 0.0
  $region9: #{outmlp_forward.3} parent=0 // pred_fallthru
    _
  %v14 = vld [vmem:[%s0] sm:$0xff]
  %v15 = vld [vmem:[%s0 + $0x8] sm:$0xff]
  %v16 = vld [vmem:[%s0 + $0x10] sm:$0xff]
  %v17 = vld [vmem:[%s0 + $0x18] sm:$0xff]
  %v18 = vld [vmem:[%s0 + $0x20] sm:$0xff]
  %v19 = vld [vmem:[%s0 + $0x28] sm:$0xff]
  %v20 = vld [vmem:[%s0 + $0x30] sm:$0xff]
  %vm21 = vcmask 261120
  %v22 = vsel %vm21, %v14, 0.0
  %v23 = vsel %vm21, %v15, 0.0
  %v24 = vadd.f32 %v22, %v23
  %v25 = vsel %vm21, %v16, 0.0
  %v26 = vadd.f32 %v24, %v25
  %v27 = vsel %vm21, %v17, 0.0
  %v28 = vadd.f32 %v26, %v27
  %v29 = vsel %vm21, %v18, 0.0
  %v30 = vadd.f32 %v28, %v29
  %v31 = vsel %vm21, %v19, 0.0
  %v32 = vadd.f32 %v30, %v31
  %v33 = vsel %vm21, %v20, 0.0
  %v34 = vadd.f32 %v32, %v33
  %v35 = vrot.slane %v34, 4
  %v36 = vadd.f32 %v34, %v35
  %v37 = vrot.slane %v36, 2
  %v38 = vadd.f32 %v36, %v37
  %v39 = vrot.slane %v38, 1
  %v40 = vadd.f32 %v38, %v39
  %v41 = vmul.f32 %v14, %v14
  %v42 = vmul.f32 %v15, %v15
  %v43 = vmul.f32 %v16, %v16
  %v44 = vmul.f32 %v17, %v17
  %v45 = vmul.f32 %v18, %v18
  %v46 = vmul.f32 %v19, %v19
  %v47 = vmul.f32 %v20, %v20
  %v48 = vsel %vm21, %v41, 0.0
  %v49 = vsel %vm21, %v42, 0.0
  %v50 = vadd.f32 %v48, %v49
  %v51 = vsel %vm21, %v43, 0.0
  %v52 = vadd.f32 %v50, %v51
  %v53 = vsel %vm21, %v44, 0.0
  %v54 = vadd.f32 %v52, %v53
  %v55 = vsel %vm21, %v45, 0.0
  %v56 = vadd.f32 %v54, %v55
  %v57 = vsel %vm21, %v46, 0.0
  %v58 = vadd.f32 %v56, %v57
  %v59 = vsel %vm21, %v47, 0.0
  %v60 = vadd.f32 %v58, %v59
  %v61 = vrot.slane %v60, 4
  %v62 = vadd.f32 %v60, %v61
  %v63 = vrot.slane %v62, 2
  %v64 = vadd.f32 %v62, %v63
  %v65 = vrot.slane %v64, 1
  %v66 = vadd.f32 %v64, %v65
  %v67 = vld [vmem:[%s1] sm:$0x3]
  %vm68 = vcmask 1040384
  %v69 = vsel %vm68, %v40, %v66
  %v70 = vadd.f32 %v67, %v69
  %vm71 = vcmask 254976
  %72 = vst.msk [vmem:[%s1] sm:$0x3] %vm71, %v70
  // Predicated region
  $region10: #{outmlp_forward.3} parent=0 // pred_check
    _
  $region11: #{outmlp_forward.3} parent=0 // pred_check_branch
    %74 = sbr.rel (0) target = $region13
  $region12: #{outmlp_forward.3} parent=0 // pred_region
    _
  $region13: #{outmlp_forward.3} parent=0 // pred_fallthru
    _
  // Predicated region
  $region14: #{outmlp_forward.3} parent=0 // pred_check
    _
  $region15: #{outmlp_forward.3} parent=0 // pred_check_branch
    %76 = sbr.rel (0) target = $region17
  $region16: #{outmlp_forward.3} parent=0 // pred_region
    _
  $region17: #{outmlp_forward.3} parent=0 // pred_fallthru
    _

// kernel: outmlp_forward.4
$region0: #{outmlp_forward.4}
  #allocation0 [shape = 'u32[]', space=smem, size = 0x4, offset = 0x4, fixed_abs, tag = 'smem constant byte address 0x4 - core index']
  #allocation1 [shape = 'u32[144,128]{1,0:T(1,128)}', space=vmem, size = 0x12000, scoped, tag = 'internal scratch']
  %s0 = inlined_call_operand.vmem [shape: f32[56,32], index: 0, kind: input, shape index: {}]
  %s1 = inlined_call_operand.vmem [shape: f32[1,32], index: 1, kind: input, shape index: {}]
  %s2 = inlined_call_operand.vmem [shape: f32[1,32], index: 2, kind: input, shape index: {}]
  %s3 = inlined_call_operand.vmem [shape: bf16[32,128], index: 3, kind: input, shape index: {}]
  %s4 = inlined_call_operand.vmem [shape: f32[1,128], index: 4, kind: input, shape index: {}]
  %s5 = inlined_call_operand.vmem [shape: bf16[56,128], index: 5, kind: output, shape index: {0}]
  %s6 = inlined_call_operand.vmem [shape: f32[1,2,128], index: 6, kind: output, shape index: {1}]
  %7 = xla_tuple %s5, %s6
  %s8 = sld [smem:[#allocation0]]
  $region38: #{outmlp_forward.4} parent=0
    _
  %s10 = ssub.s32 1, %s8
  %s11 = scalar_select 0, %s10, %s8
  // Predicated region
  $region2: #{outmlp_forward.4} parent=0 // pred_check
    _
  $region3: #{outmlp_forward.4} parent=0 // pred_check_branch
    %13 = sbr.rel (0) target = $region5
  $region4: #{outmlp_forward.4} parent=0 // pred_region
    _
  $region5: #{outmlp_forward.4} parent=0 // pred_fallthru
    _
  // Predicated region
  $region6: #{outmlp_forward.4} parent=0 // pred_check
    _
  $region7: #{outmlp_forward.4} parent=0 // pred_check_branch
    %15 = sbr.rel (0) target = $region9
  $region8: #{outmlp_forward.4} parent=0 // pred_region
    _
  $region9: #{outmlp_forward.4} parent=0 // pred_fallthru
    _
  // Predicated region
  $region10: #{outmlp_forward.4} parent=0 // pred_check
    _
  $region11: #{outmlp_forward.4} parent=0 // pred_check_branch
    %17 = sbr.rel (0) target = $region13
  $region12: #{outmlp_forward.4} parent=0 // pred_region
    _
  $region13: #{outmlp_forward.4} parent=0 // pred_fallthru
    _
  // Predicated region
  $region14: #{outmlp_forward.4} parent=0 // pred_check
    _
  $region15: #{outmlp_forward.4} parent=0 // pred_check_branch
    %19 = sbr.rel (0) target = $region17
  $region16: #{outmlp_forward.4} parent=0 // pred_region
    _
  $region17: #{outmlp_forward.4} parent=0 // pred_fallthru
    _
  // Predicated region
  $region18: #{outmlp_forward.4} parent=0 // pred_check
    _
  $region19: #{outmlp_forward.4} parent=0 // pred_check_branch
    %21 = sbr.rel (0) target = $region21
  $region20: #{outmlp_forward.4} parent=0 // pred_region
    _
  $region21: #{outmlp_forward.4} parent=0 // pred_fallthru
    _
  %v23 = vld [vmem:[%s0] sm:$0xff]
  %v24 = vld [vmem:[%s0 + $0x8] sm:$0xff]
  %v25 = vld [vmem:[%s0 + $0x10] sm:$0xff]
  %v26 = vld [vmem:[%s0 + $0x18] sm:$0xff]
  %v27 = vld [vmem:[%s0 + $0x20] sm:$0xff]
  %v28 = vld [vmem:[%s0 + $0x28] sm:$0xff]
  %v29 = vld [vmem:[%s0 + $0x30] sm:$0xff]
  %v30 = vld [vmem:[%s1] sm:$0x1]
  %v32 = vlaneseq
  %v33 = vshrl.u32 %v32, 7
  %v34 = vsub.s32 0, %v33
  %v35 = vrot.slane %v30, %v34
  %v37 = vmul.f32 %v23, %v35
  %v38 = vmul.f32 %v24, %v35
  %v39 = vmul.f32 %v25, %v35
  %v40 = vmul.f32 %v26, %v35
  %v41 = vmul.f32 %v27, %v35
  %v42 = vmul.f32 %v28, %v35
  %v43 = vmul.f32 %v29, %v35
  %v44 = vld [vmem:[%s2] sm:$0x1]
  %v46 = vlaneseq
  %v47 = vshrl.u32 %v46, 7
  %v48 = vsub.s32 0, %v47
  %v49 = vrot.slane %v44, %v48
  %v51 = vadd.f32 %v37, %v49
  %v52 = vadd.f32 %v38, %v49
  %v53 = vadd.f32 %v39, %v49
  %v54 = vadd.f32 %v40, %v49
  %v55 = vadd.f32 %v41, %v49
  %v56 = vadd.f32 %v42, %v49
  %v57 = vadd.f32 %v43, %v49
  %v58 = vpack.c.bf16 %v52, %v51
  %v59 = vpack.c.bf16 %v54, %v53
  %v60 = vpack.c.bf16 %v56, %v55
  %v61 = vpack.c.bf16 %v57, %v57
  %v62 = vld [vmem:[%s3] sm:$0xf]
  %v63 = vld [vmem:[%s3 + $0x4] sm:$0xf]
  %v64 = vld [vmem:[%s3 + $0x8] sm:$0xf]
  %v65 = vld [vmem:[%s3 + $0xc] sm:$0xf]
  %v66 = vld [vmem:[%s4] sm:$0x1]
  %v68 = vlaneseq
  %v69 = vshrl.u32 %v68, 7
  %v70 = vsub.s32 0, %v69
  %v71 = vrot.slane %v66, %v70
  %v77 = vunpack.c.l.b16 %v62
  %v78 = vunpack.c.l.b16 %v63
  %v79 = vunpack.c.l.b16 %v64
  %v80 = vunpack.c.l.b16 %v65
  %v81 = vpack.c.b16 %v78, %v77
  %v82 = vpack.c.b16 %v80, %v79
  %vm85 = vcmask 261120
  %v87 = vsel %vm85, %v58, 0
  %v90 = vsel %vm85, %v59, 0
  %v93 = vsel %vm85, %v60, 0
  %v96 = vsel %vm85, %v61, 0
  %98 = vmatprep.subr.bf16.mxu0 0
  %99 = vmatpush1.bf16.msra.mxu0 %v81
  %100 = vmatprep.subr.bf16.mxu0 0
  %101 = vmatpush1.bf16.msra.mxu0 %v82
  %102 = vmatprep.subr.bf16.mxu0 0
  %103 = vmatpush1.bf16.msra.mxu0 0
  %104 = vmatprep.subr.bf16.mxu0 0
  %105 = vmatpush1.bf16.msra.mxu0 0
  %106 = vmatprep.subr.bf16.mxu0 0
  %107 = vmatpush1.bf16.msra.mxu0 0
  %108 = vmatprep.subr.bf16.mxu0 0
  %109 = vmatpush1.bf16.msra.mxu0 0
  %110 = vmatprep.subr.bf16.mxu0 0
  %111 = vmatpush1.bf16.msra.mxu0 0
  %112 = vmatprep.subr.bf16.mxu0 0
  %113 = vmatpush1.bf16.msra.mxu0 0
  %114 = vmatprep.subr.bf16.mxu0 0
  %115 = vmatpush1.bf16.msra.mxu0 0
  %116 = vmatprep.subr.bf16.mxu0 0
  %117 = vmatpush1.bf16.msra.mxu0 0
  %118 = vmatprep.subr.bf16.mxu0 0
  %119 = vmatpush1.bf16.msra.mxu0 0
  %120 = vmatprep.subr.bf16.mxu0 0
  %121 = vmatpush1.bf16.msra.mxu0 0
  %122 = vmatprep.subr.bf16.mxu0 0
  %123 = vmatpush1.bf16.msra.mxu0 0
  %124 = vmatprep.subr.bf16.mxu0 0
  %125 = vmatpush1.bf16.msra.mxu0 0
  %126 = vmatprep.subr.bf16.mxu0 0
  %127 = vmatpush1.bf16.msra.mxu0 0
  %128 = vmatprep.subr.bf16.mxu0 0
  %129 = vmatpush1.bf16.msra.mxu0 0
  %130 = vmatprep.mubr.bf16.mxu0 0
  %131 = vmatmul.mubr.bf16.gmra.mrb[0].mxu0 %v87
  %v132 = vpop.f32.mrb[0].mxu0
  %v133 = vadd.f32 %v71, %v132
  %v134 = vpop.f32.mrb[0].mxu0
  %v135 = vpop.f32.mrb[0].mxu0
  %v136 = vadd.f32 %v71, %v135
  %v137 = vpop.f32.mrb[0].mxu0
  %138 = vmatprep.mubr.bf16.mxu0 0
  %139 = vmatmul.mubr.bf16.gmra.mrb[0].mxu0 %v90
  %v140 = vpop.f32.mrb[0].mxu0
  %v141 = vadd.f32 %v71, %v140
  %v142 = vpop.f32.mrb[0].mxu0
  %v143 = vpop.f32.mrb[0].mxu0
  %v144 = vadd.f32 %v71, %v143
  %v145 = vpop.f32.mrb[0].mxu0
  %146 = vmatprep.mubr.bf16.mxu0 0
  %147 = vmatmul.mubr.bf16.gmra.mrb[0].mxu0 %v93
  %v148 = vpop.f32.mrb[0].mxu0
  %v149 = vadd.f32 %v71, %v148
  %v150 = vpop.f32.mrb[0].mxu0
  %v151 = vpop.f32.mrb[0].mxu0
  %v152 = vadd.f32 %v71, %v151
  %v153 = vpop.f32.mrb[0].mxu0
  %154 = vmatprep.mubr.bf16.mxu0 0
  %155 = vmatmul.mubr.bf16.gmra.mrb[0].mxu0 %v96
  %v156 = vpop.f32.mrb[0].mxu0
  %v157 = vadd.f32 %v71, %v156
  %v158 = vpop.f32.mrb[0].mxu0
  %v159 = vpop.f32.mrb[0].mxu0
  %v160 = vpop.f32.mrb[0].mxu0
  %161 = vdwg.mxu0
  %v162 = vmax.f32 %v133, 0.0
  %v163 = vmax.f32 %v136, 0.0
  %v164 = vmax.f32 %v141, 0.0
  %v165 = vmax.f32 %v144, 0.0
  %v166 = vmax.f32 %v149, 0.0
  %v167 = vmax.f32 %v152, 0.0
  %v168 = vmax.f32 %v157, 0.0
  %s169 = smul.u32 0, 56
  %v170 = vlaneseq
  %v171 = vshrl.u32 %v170, 7
  %v172 = vadd.s32 %v171, 8
  %v173 = vadd.s32 %v171, 16
  %v174 = vadd.s32 %v171, 24
  %v175 = vadd.s32 %v171, 32
  %v176 = vadd.s32 %v171, 40
  %v177 = vadd.s32 %v171, 48
  %v178 = vstv %s169
  %v179 = vadd.s32 %v178, %v171
  %v180 = vadd.s32 %v178, %v172
  %v181 = vadd.s32 %v178, %v173
  %v182 = vadd.s32 %v178, %v174
  %v183 = vadd.s32 %v178, %v175
  %v184 = vadd.s32 %v178, %v176
  %v185 = vadd.s32 %v178, %v177
  %vm186 = vcmp.lt.s32.totalorder %v179, 50
  %vm187 = vcmp.lt.s32.totalorder %v180, 50
  %vm188 = vcmp.lt.s32.totalorder %v181, 50
  %vm189 = vcmp.lt.s32.totalorder %v182, 50
  %vm190 = vcmp.lt.s32.totalorder %v183, 50
  %vm191 = vcmp.lt.s32.totalorder %v184, 50
  %vm192 = vcmp.lt.s32.totalorder %v185, 50
  %v193 = vsel %vm186, 1, 0
  %v194 = vsel %vm187, 1, 0
  %v195 = vsel %vm188, 1, 0
  %v196 = vsel %vm189, 1, 0
  %v197 = vsel %vm190, 1, 0
  %v198 = vsel %vm191, 1, 0
  %v199 = vsel %vm192, 1, 0
  %vm200 = vcmp.eq.s32.totalorder %v193, 1
  %vm201 = vcmp.eq.s32.totalorder %v194, 1
  %vm202 = vcmp.eq.s32.totalorder %v195, 1
  %vm203 = vcmp.eq.s32.totalorder %v196, 1
  %vm204 = vcmp.eq.s32.totalorder %v197, 1
  %vm205 = vcmp.eq.s32.totalorder %v198, 1
  %vm206 = vcmp.eq.s32.totalorder %v199, 1
  %v207 = vsel %vm200, %v162, 0.0
  %v208 = vsel %vm201, %v163, 0.0
  %v209 = vsel %vm202, %v164, 0.0
  %v210 = vsel %vm203, %v165, 0.0
  %v211 = vsel %vm204, %v166, 0.0
  %v212 = vsel %vm205, %v167, 0.0
  %v213 = vsel %vm206, %v168, 0.0
  %v214 = vpack.c.bf16 %v208, %v207
  %v215 = vpack.c.bf16 %v210, %v209
  %v216 = vpack.c.bf16 %v212, %v211
  %v217 = vpack.c.bf16 %v213, %v213
  %v222 = vunpack.c.l.b16 %v214
  %v223 = vunpack.c.h.b16 %v214
  %v224 = vunpack.c.l.b16 %v215
  %v225 = vunpack.c.h.b16 %v215
  %v226 = vunpack.c.l.b16 %v216
  %v227 = vunpack.c.h.b16 %v216
  %v228 = vunpack.c.l.b16 %v217
  %v229 = vpack.c.b16 %v222, %v222
  %v230 = vpack.c.b16 %v223, %v223
  %v231 = vpack.c.b16 %v224, %v224
  %v232 = vpack.c.b16 %v225, %v225
  %v233 = vpack.c.b16 %v226, %v226
  %v234 = vpack.c.b16 %v227, %v227
  %v235 = vpack.c.b16 %v228, %v228
  %243 = vst [vmem:[%s5] sm:$0xf] %v229
  %244 = vst [vmem:[%s5 + $0x4] sm:$0xf] %v230
  %245 = vst [vmem:[%s5 + $0x8] sm:$0xf] %v231
  %246 = vst [vmem:[%s5 + $0xc] sm:$0xf] %v232
  %247 = vst [vmem:[%s5 + $0x10] sm:$0xf] %v233
  %248 = vst [vmem:[%s5 + $0x14] sm:$0xf] %v234
  %249 = vst [vmem:[%s5 + $0x18] sm:$0xf] %v235
  %v250 = vadd.f32 %v207, %v208
  %v251 = vadd.f32 %v250, %v209
  %v252 = vadd.f32 %v251, %v210
  %v253 = vadd.f32 %v252, %v211
  %v254 = vadd.f32 %v253, %v212
  %v255 = vadd.f32 %v254, %v213
  %v256 = vrot.slane %v255, 4
  %v257 = vadd.f32 %v255, %v256
  %v258 = vrot.slane %v257, 2
  %v259 = vadd.f32 %v257, %v258
  %v260 = vrot.slane %v259, 1
  %v261 = vadd.f32 %v259, %v260
  %v262 = vmul.f32 %v207, %v207
  %v263 = vmul.f32 %v208, %v208
  %v264 = vmul.f32 %v209, %v209
  %v265 = vmul.f32 %v210, %v210
  %v266 = vmul.f32 %v211, %v211
  %v267 = vmul.f32 %v212, %v212
  %v268 = vmul.f32 %v213, %v213
  %v269 = vadd.f32 %v262, %v263
  %v270 = vadd.f32 %v269, %v264
  %v271 = vadd.f32 %v270, %v265
  %v272 = vadd.f32 %v271, %v266
  %v273 = vadd.f32 %v272, %v267
  %v274 = vadd.f32 %v273, %v268
  %v275 = vrot.slane %v274, 4
  %v276 = vadd.f32 %v274, %v275
  %v277 = vrot.slane %v276, 2
  %v278 = vadd.f32 %v276, %v277
  %v279 = vrot.slane %v278, 1
  %v280 = vadd.f32 %v278, %v279
  %vm281 = vcmask 1040384
  %v282 = vsel %vm281, %v261, %v280
  %283 = vst [vmem:[%s6] sm:$0x3] %v282
  // Predicated region
  $region22: #{outmlp_forward.4} parent=0 // pred_check
    _
  $region23: #{outmlp_forward.4} parent=0 // pred_check_branch
    %285 = sbr.rel (0) target = $region25
  $region24: #{outmlp_forward.4} parent=0 // pred_region
    _
  $region25: #{outmlp_forward.4} parent=0 // pred_fallthru
    _
  // Predicated region
  $region26: #{outmlp_forward.4} parent=0 // pred_check
    _
  $region27: #{outmlp_forward.4} parent=0 // pred_check_branch
    %287 = sbr.rel (0) target = $region29
  $region28: #{outmlp_forward.4} parent=0 // pred_region
    _
  $region29: #{outmlp_forward.4} parent=0 // pred_fallthru
    _
  // Predicated region
  $region30: #{outmlp_forward.4} parent=0 // pred_check
    _
  $region31: #{outmlp_forward.4} parent=0 // pred_check_branch
    %289 = sbr.rel (0) target = $region33
  $region32: #{outmlp_forward.4} parent=0 // pred_region
    _
  $region33: #{outmlp_forward.4} parent=0 // pred_fallthru
    _
  // Predicated region
  $region34: #{outmlp_forward.4} parent=0 // pred_check
    _
  $region35: #{outmlp_forward.4} parent=0 // pred_check_branch
    %291 = sbr.rel (0) target = $region37
  $region36: #{outmlp_forward.4} parent=0 // pred_region
    _
  $region37: #{outmlp_forward.4} parent=0 // pred_fallthru
    _

// kernel: outmlp_forward.5
$region0: #{outmlp_forward.5}
  #allocation0 [shape = 'u32[]', space=smem, size = 0x4, offset = 0x4, fixed_abs, tag = 'smem constant byte address 0x4 - core index']
  #allocation1 [shape = 'u32[144,128]{1,0:T(1,128)}', space=vmem, size = 0x12000, scoped, tag = 'internal scratch']
  %s0 = inlined_call_operand.vmem [shape: bf16[56,128], index: 0, kind: input, shape index: {}]
  %s1 = inlined_call_operand.vmem [shape: bf16[128,128], index: 1, kind: input, shape index: {}]
  %s2 = inlined_call_operand.vmem [shape: f32[1,128], index: 2, kind: input, shape index: {}]
  %s3 = inlined_call_operand.vmem [shape: f32[56,128], index: 3, kind: output, shape index: {}]
  %s4 = sld [smem:[#allocation0]]
  $region22: #{outmlp_forward.5} parent=0
    _
  %s6 = ssub.s32 1, %s4
  %s7 = scalar_select 0, %s6, %s4
  // Predicated region
  $region2: #{outmlp_forward.5} parent=0 // pred_check
    _
  $region3: #{outmlp_forward.5} parent=0 // pred_check_branch
    %9 = sbr.rel (0) target = $region5
  $region4: #{outmlp_forward.5} parent=0 // pred_region
    _
  $region5: #{outmlp_forward.5} parent=0 // pred_fallthru
    _
  // Predicated region
  $region6: #{outmlp_forward.5} parent=0 // pred_check
    _
  $region7: #{outmlp_forward.5} parent=0 // pred_check_branch
    %11 = sbr.rel (0) target = $region9
  $region8: #{outmlp_forward.5} parent=0 // pred_region
    _
  $region9: #{outmlp_forward.5} parent=0 // pred_fallthru
    _
  // Predicated region
  $region10: #{outmlp_forward.5} parent=0 // pred_check
    _
  $region11: #{outmlp_forward.5} parent=0 // pred_check_branch
    %13 = sbr.rel (0) target = $region13
  $region12: #{outmlp_forward.5} parent=0 // pred_region
    _
  $region13: #{outmlp_forward.5} parent=0 // pred_fallthru
    _
  %v15 = vld [vmem:[%s0] sm:$0xf]
  %v16 = vld [vmem:[%s0 + $0x4] sm:$0xf]
  %v17 = vld [vmem:[%s0 + $0x8] sm:$0xf]
  %v18 = vld [vmem:[%s0 + $0xc] sm:$0xf]
  %v19 = vld [vmem:[%s0 + $0x10] sm:$0xf]
  %v20 = vld [vmem:[%s0 + $0x14] sm:$0xf]
  %v21 = vld [vmem:[%s0 + $0x18] sm:$0xf]
  %v22 = vld [vmem:[%s1] sm:$0xf]
  %v23 = vld [vmem:[%s1 + $0x4] sm:$0xf]
  %v24 = vld [vmem:[%s1 + $0x8] sm:$0xf]
  %v25 = vld [vmem:[%s1 + $0xc] sm:$0xf]
  %v26 = vld [vmem:[%s1 + $0x10] sm:$0xf]
  %v27 = vld [vmem:[%s1 + $0x14] sm:$0xf]
  %v28 = vld [vmem:[%s1 + $0x18] sm:$0xf]
  %v29 = vld [vmem:[%s1 + $0x1c] sm:$0xf]
  %v30 = vld [vmem:[%s1 + $0x20] sm:$0xf]
  %v31 = vld [vmem:[%s1 + $0x24] sm:$0xf]
  %v32 = vld [vmem:[%s1 + $0x28] sm:$0xf]
  %v33 = vld [vmem:[%s1 + $0x2c] sm:$0xf]
  %v34 = vld [vmem:[%s1 + $0x30] sm:$0xf]
  %v35 = vld [vmem:[%s1 + $0x34] sm:$0xf]
  %v36 = vld [vmem:[%s1 + $0x38] sm:$0xf]
  %v37 = vld [vmem:[%s1 + $0x3c] sm:$0xf]
  %v38 = vld [vmem:[%s2] sm:$0x1]
  %v40 = vlaneseq
  %v41 = vshrl.u32 %v40, 7
  %v42 = vsub.s32 0, %v41
  %v43 = vrot.slane %v38, %v42
  %v52 = vunpack.c.l.b16 %v15
  %v53 = vunpack.c.l.b16 %v16
  %v54 = vunpack.c.l.b16 %v17
  %v55 = vunpack.c.l.b16 %v18
  %v56 = vunpack.c.l.b16 %v19
  %v57 = vunpack.c.l.b16 %v20
  %v58 = vunpack.c.l.b16 %v21
  %v59 = vpack.c.b16 %v53, %v52
  %v60 = vpack.c.b16 %v55, %v54
  %v61 = vpack.c.b16 %v57, %v56
  %v62 = vpack.c.b16 %v58, %v58
  %v83 = vunpack.c.l.b16 %v22
  %v84 = vunpack.c.l.b16 %v23
  %v85 = vunpack.c.l.b16 %v24
  %v86 = vunpack.c.l.b16 %v25
  %v87 = vunpack.c.l.b16 %v26
  %v88 = vunpack.c.l.b16 %v27
  %v89 = vunpack.c.l.b16 %v28
  %v90 = vunpack.c.l.b16 %v29
  %v91 = vunpack.c.l.b16 %v30
  %v92 = vunpack.c.l.b16 %v31
  %v93 = vunpack.c.l.b16 %v32
  %v94 = vunpack.c.l.b16 %v33
  %v95 = vunpack.c.l.b16 %v34
  %v96 = vunpack.c.l.b16 %v35
  %v97 = vunpack.c.l.b16 %v36
  %v98 = vunpack.c.l.b16 %v37
  %v99 = vpack.c.b16 %v84, %v83
  %v100 = vpack.c.b16 %v86, %v85
  %v101 = vpack.c.b16 %v88, %v87
  %v102 = vpack.c.b16 %v90, %v89
  %v103 = vpack.c.b16 %v92, %v91
  %v104 = vpack.c.b16 %v94, %v93
  %v105 = vpack.c.b16 %v96, %v95
  %v106 = vpack.c.b16 %v98, %v97
  %115 = vmatprep.subr.bf16.mxu0 0
  %116 = vmatpush1.bf16.msra.mxu0 %v99
  %117 = vmatprep.subr.bf16.mxu0 0
  %118 = vmatpush1.bf16.msra.mxu0 %v100
  %119 = vmatprep.subr.bf16.mxu0 0
  %120 = vmatpush1.bf16.msra.mxu0 %v101
  %121 = vmatprep.subr.bf16.mxu0 0
  %122 = vmatpush1.bf16.msra.mxu0 %v102
  %123 = vmatprep.subr.bf16.mxu0 0
  %124 = vmatpush1.bf16.msra.mxu0 %v103
  %125 = vmatprep.subr.bf16.mxu0 0
  %126 = vmatpush1.bf16.msra.mxu0 %v104
  %127 = vmatprep.subr.bf16.mxu0 0
  %128 = vmatpush1.bf16.msra.mxu0 %v105
  %129 = vmatprep.subr.bf16.mxu0 0
  %130 = vmatpush1.bf16.msra.mxu0 %v106
  %131 = vmatprep.subr.bf16.mxu0 0
  %132 = vmatpush1.bf16.msra.mxu0 0
  %133 = vmatprep.subr.bf16.mxu0 0
  %134 = vmatpush1.bf16.msra.mxu0 0
  %135 = vmatprep.subr.bf16.mxu0 0
  %136 = vmatpush1.bf16.msra.mxu0 0
  %137 = vmatprep.subr.bf16.mxu0 0
  %138 = vmatpush1.bf16.msra.mxu0 0
  %139 = vmatprep.subr.bf16.mxu0 0
  %140 = vmatpush1.bf16.msra.mxu0 0
  %141 = vmatprep.subr.bf16.mxu0 0
  %142 = vmatpush1.bf16.msra.mxu0 0
  %143 = vmatprep.subr.bf16.mxu0 0
  %144 = vmatpush1.bf16.msra.mxu0 0
  %145 = vmatprep.subr.bf16.mxu0 0
  %146 = vmatpush1.bf16.msra.mxu0 0
  %147 = vmatprep.mubr.bf16.mxu0 0
  %148 = vmatmul.mubr.bf16.gmra.mrb[0].mxu0 %v59
  %v149 = vpop.f32.mrb[0].mxu0
  %v150 = vadd.f32 %v43, %v149
  %v151 = vpop.f32.mrb[0].mxu0
  %v152 = vpop.f32.mrb[0].mxu0
  %v153 = vadd.f32 %v43, %v152
  %v154 = vpop.f32.mrb[0].mxu0
  %155 = vmatprep.mubr.bf16.mxu0 0
  %156 = vmatmul.mubr.bf16.gmra.mrb[0].mxu0 %v60
  %v157 = vpop.f32.mrb[0].mxu0
  %v158 = vadd.f32 %v43, %v157
  %v159 = vpop.f32.mrb[0].mxu0
  %v160 = vpop.f32.mrb[0].mxu0
  %v161 = vadd.f32 %v43, %v160
  %v162 = vpop.f32.mrb[0].mxu0
  %163 = vmatprep.mubr.bf16.mxu0 0
  %164 = vmatmul.mubr.bf16.gmra.mrb[0].mxu0 %v61
  %v165 = vpop.f32.mrb[0].mxu0
  %v166 = vadd.f32 %v43, %v165
  %v167 = vpop.f32.mrb[0].mxu0
  %v168 = vpop.f32.mrb[0].mxu0
  %v169 = vadd.f32 %v43, %v168
  %v170 = vpop.f32.mrb[0].mxu0
  %171 = vmatprep.mubr.bf16.mxu0 0
  %172 = vmatmul.mubr.bf16.gmra.mrb[0].mxu0 %v62
  %v173 = vpop.f32.mrb[0].mxu0
  %v174 = vadd.f32 %v43, %v173
  %v175 = vpop.f32.mrb[0].mxu0
  %v176 = vpop.f32.mrb[0].mxu0
  %v177 = vpop.f32.mrb[0].mxu0
  %178 = vdwg.mxu0
  %179 = vst [vmem:[%s3] sm:$0xff] %v150
  %180 = vst [vmem:[%s3 + $0x8] sm:$0xff] %v153
  %181 = vst [vmem:[%s3 + $0x10] sm:$0xff] %v158
  %182 = vst [vmem:[%s3 + $0x18] sm:$0xff] %v161
  %183 = vst [vmem:[%s3 + $0x20] sm:$0xff] %v166
  %184 = vst [vmem:[%s3 + $0x28] sm:$0xff] %v169
  %185 = vst [vmem:[%s3 + $0x30] sm:$0xff] %v174
  // Predicated region
  $region14: #{outmlp_forward.5} parent=0 // pred_check
    _
  $region15: #{outmlp_forward.5} parent=0 // pred_check_branch
    %187 = sbr.rel (0) target = $region17
  $region16: #{outmlp_forward.5} parent=0 // pred_region
    _
  $region17: #{outmlp_forward.5} parent=0 // pred_fallthru
    _
  // Predicated region
  $region18: #{outmlp_forward.5} parent=0 // pred_check
    _
  $region19: #{outmlp_forward.5} parent=0 // pred_check_branch
    %189 = sbr.rel (0) target = $region21
  $region20: #{outmlp_forward.5} parent=0 // pred_region
    _
  $region21: #{outmlp_forward.5} parent=0 // pred_fallthru
    _

</llo_original>
